<compile_context>
chip_gen: v7x
topology: tpu7x:2x2x1
jax: 0.10.0
libtpu: 0.0.40
codegen_flags: <defaults>
</compile_context>

<pallas_src>
import functools

import jax
import jax.numpy as jnp
from jax import lax
from jax.experimental import pallas as pl
from jax.experimental.pallas import tpu as pltpu


_LANES = 128
_SUBLANES = 8


def _round_up(x, m):
    return (x + m - 1) // m * m


def _mask_kernel(logits_ref, gumbel_ref, mask_ref, *, k, inv_tau):
    """Straight-through sparse top-k mask on an (R, 128) lane-dense layout.

    Padded entries carry logits = -inf so their scores are -inf and they are
    never selected.  The softmax term of the straight-through estimator is
    dropped: its forward contribution cancels ((hard - soft) + soft == hard
    to 1 ulp), so the mask value is exactly the 0/1 hard mask.
    # TODO(synk): wrap in jax.custom_vjp (grad = d soft_mask / d logits) if
    # this is ever used for training; pallas_call is not differentiable.
    """
    l = logits_ref[...]                       # (R, 128) f32, padding = -inf
    g = gumbel_ref[...]                       # (R, 128) f32, padding = 0
    shape = l.shape

    scores = (l + g) * inv_tau                # divide folded into multiply
    row = lax.broadcasted_iota(jnp.int32, shape, 0)
    col = lax.broadcasted_iota(jnp.int32, shape, 1)
    idx = row * _LANES + col                  # flat row-major index, int32
    big = jnp.int32(shape[0] * _LANES)        # sentinel > any valid index
    neg_inf = jnp.float32(-jnp.inf)

    hard = jnp.zeros_like(l)
    remaining = scores
    # k is a small static int: unrolled iterative max selection (same index
    # set as torch.topk for distinct scores; ties -> lowest flat index).
    for _ in range(k):
        # Cross-vreg/sublane reduce first (VPU-dominant), then one
        # single-vreg lane reduce (XLU).
        m = jnp.max(jnp.max(remaining, axis=0, keepdims=True),
                    axis=1, keepdims=True)                       # (1, 1)
        cand = jnp.where(remaining == m, idx, big)
        sel = jnp.min(jnp.min(cand, axis=0, keepdims=True),
                      axis=1, keepdims=True)                     # (1, 1) i32
        onehot = idx == sel
        # Guard: once every remaining score is -inf (k >= #finite entries),
        # stop accumulating so no mask value ever exceeds 1.
        valid = m > neg_inf                                      # (1, 1)
        hard = hard + jnp.where(valid, onehot.astype(l.dtype), 0.0)
        remaining = jnp.where(onehot, neg_inf, remaining)

    mask_ref[...] = hard


def _apply_mask_kernel(x_ref, mask_ref, out_ref):
    # (TB, C, H, W) * (1, C, H, W) broadcast multiply on the VPU in x's
    # native dtype; hides entirely under the x DMA (kernel is HBM-bound).
    out_ref[...] = x_ref[...] * mask_ref[...]


def _pick_batch_tile(batch, block_row_bytes):
    """Batch-tile size for the apply kernel.

    Targets (a) >= min(batch, 4) grid steps so the in/out DMAs genuinely
    double-buffer and the "parallel" batch axis shards across both v7x
    TensorCores, and (b) per-block bytes <= ~1.5 MiB so the double-buffered
    in+out working set (~4x block + resident mask) stays far below every
    generation's default scoped-VMEM limit (16 MiB on v5e, 32 MiB v6e/v7x).
    The returned tile divides `batch` exactly (no partial block).
    """
    cap = max(1, (1536 * 1024) // max(1, block_row_bytes))   # VMEM byte cap
    cap = min(cap, max(1, batch // min(batch, 4)))           # >= ~4 grid steps
    if cap >= _SUBLANES:
        cap = (cap // _SUBLANES) * _SUBLANES                 # sublane-friendly
    cap = min(cap, batch)
    for d in range(cap, 0, -1):                              # largest divisor
        if batch % d == 0:
            return d
    return 1


def sparse_input_mask_forward(x, logits, gumbel, *, k=1, tau=0.1):
    """x: (B, C, H, W), logits/gumbel: (C, H, W) -> (x * mask, mask).

    masked_x keeps x's dtype and layout (no wrapper-side reshape/up-cast of
    x).  The mask is returned with shape (1, C, H, W); torch's
    .expand(B, ...) is a zero-copy view, so consumers can broadcast lazily.
    """
    B, C, H, W = x.shape
    assert logits.shape == (C, H, W) and gumbel.shape == (C, H, W), \
        "Input size mismatch with mask"
    N = C * H * W

    # ---- kernel 1: mask on a lane-dense (rows, 128) layout (tiny arrays) ----
    n_pad = _round_up(N, _SUBLANES * _LANES)
    assert n_pad < 2 ** 31, "flat index must fit in int32"
    rows = n_pad // _LANES
    logits_flat = logits.reshape(-1).astype(jnp.float32)
    gumbel_flat = gumbel.reshape(-1).astype(jnp.float32)
    if n_pad != N:
        logits_flat = jnp.concatenate(
            [logits_flat, jnp.full((n_pad - N,), -jnp.inf, jnp.float32)])
        gumbel_flat = jnp.concatenate(
            [gumbel_flat, jnp.zeros((n_pad - N,), jnp.float32)])
    logits_2d = logits_flat.reshape(rows, _LANES)
    gumbel_2d = gumbel_flat.reshape(rows, _LANES)

    mask_kernel = functools.partial(_mask_kernel, k=k, inv_tau=1.0 / float(tau))
    mask_2d = pl.pallas_call(
        mask_kernel,
        out_shape=jax.ShapeDtypeStruct((rows, _LANES), jnp.float32),
        grid=(1,),
        in_specs=[
            pl.BlockSpec((rows, _LANES), lambda i: (0, 0)),
            pl.BlockSpec((rows, _LANES), lambda i: (0, 0)),
        ],
        out_specs=pl.BlockSpec((rows, _LANES), lambda i: (0, 0)),
        compiler_params=pltpu.CompilerParams(
            dimension_semantics=("arbitrary",)),
    )(logits_2d, gumbel_2d)

    binary_mask = mask_2d.reshape(n_pad)[:N].reshape(1, C, H, W)

    # ---- kernel 2: batch-tiled broadcast multiply in x's native layout ----
    # Mask values are exactly 0/1, so casting to x.dtype is lossless.
    mask_x_dtype = binary_mask.astype(x.dtype)
    itemsize = jnp.dtype(x.dtype).itemsize
    # Per-batch-row VMEM footprint including (8, 128) tile padding.
    row_bytes = C * _round_up(H, _SUBLANES) * _round_up(W, _LANES) * itemsize
    tb = _pick_batch_tile(B, row_bytes)
    grid_b = B // tb

    masked_x = pl.pallas_call(
        _apply_mask_kernel,
        out_shape=jax.ShapeDtypeStruct((B, C, H, W), x.dtype),
        grid=(grid_b,),
        in_specs=[
            pl.BlockSpec((tb, C, H, W), lambda i: (i, 0, 0, 0)),
            # Constant block index: the mask is DMA'd once and stays in VMEM.
            pl.BlockSpec((1, C, H, W), lambda i: (0, 0, 0, 0)),
        ],
        out_specs=pl.BlockSpec((tb, C, H, W), lambda i: (i, 0, 0, 0)),
        compiler_params=pltpu.CompilerParams(
            dimension_semantics=("parallel",)),
    )(x, mask_x_dtype)

    return masked_x, binary_mask


if __name__ == "__main__":
    B, C, H, W = 2, 4, 16, 16
    K, TAU = 1, 0.1

    key = jax.random.PRNGKey(0)
    k_x, k_logits, k_exp = jax.random.split(key, 3)

    x = jax.random.normal(k_x, (B, C, H, W), dtype=jnp.float32)
    # nn.Parameter(torch.randn(C, H, W)) -> deterministic standard-normal init
    logits = jax.random.normal(k_logits, (C, H, W), dtype=jnp.float32)
    # gumbel_noise = -log(Exp(1) sample), sampled outside the kernel
    gumbel = -jnp.log(jax.random.exponential(k_exp, (C, H, W), dtype=jnp.float32))

    masked_x, binary_mask = sparse_input_mask_forward(x, logits, gumbel, k=K, tau=TAU)
    masked_x = jax.block_until_ready(masked_x)
    binary_mask = jax.block_until_ready(binary_mask)

    assert masked_x.shape == (B, C, H, W) and masked_x.dtype == x.dtype
    assert binary_mask.shape == (1, C, H, W)

    # Pure-JAX reference of the torch module's forward pass.
    flat_logits = logits.reshape(-1)
    scores = (flat_logits + gumbel.reshape(-1)) / TAU
    topk_idx = jnp.argsort(-scores)[:K]
    hard = jnp.zeros_like(flat_logits).at[topk_idx].set(1.0)
    soft = jax.nn.softmax(flat_logits / TAU)
    ref_mask = ((hard - soft) + soft).reshape(1, C, H, W)
    ref_out = x * ref_mask

    assert jnp.allclose(binary_mask, ref_mask, atol=1e-4, rtol=1e-4)
    assert jnp.allclose(masked_x, ref_out, atol=1e-4, rtol=1e-4)
    # mask sums to exactly k (k hard one-hots)
    assert abs(float(jnp.sum(binary_mask)) - K) < 1e-3

    print("KERNEL_OK")
</pallas_src>

<mosaic_0001>
module attributes {stable_mosaic.version = 11 : i64} {
  func.func @_mask_kernel(%arg0: i32, %arg1: memref<8x128xf32, #tpu.memory_space<vmem>>, %arg2: memref<8x128xf32, #tpu.memory_space<vmem>>, %arg3: memref<8x128xf32, #tpu.memory_space<vmem>>) attributes {dimension_semantics = [#tpu.dimension_semantics<arbitrary>], iteration_bounds = array<i64: 1>, scalar_prefetch = 0 : i64, scratch_operands = 0 : i64, tpu.core_type = #tpu.core_type<tc>, window_params = [{pipeline_mode = #tpu.pipeline_mode<synchronous>, transform_indices = @transform_0, window_bounds = array<i64: 8, 128>}, {pipeline_mode = #tpu.pipeline_mode<synchronous>, transform_indices = @transform_1, window_bounds = array<i64: 8, 128>}, {pipeline_mode = #tpu.pipeline_mode<synchronous>, transform_indices = @transform_2, window_bounds = array<i64: 8, 128>}]} {
    %c0 = arith.constant 0 : index
    %c0_0 = arith.constant 0 : index
    %0 = vector.load %arg1[%c0, %c0_0] : memref<8x128xf32, #tpu.memory_space<vmem>>, vector<8x128xf32>
    %c0_1 = arith.constant 0 : index
    %c0_2 = arith.constant 0 : index
    %1 = vector.load %arg2[%c0_1, %c0_2] : memref<8x128xf32, #tpu.memory_space<vmem>>, vector<8x128xf32>
    %2 = arith.addf %0, %1 : vector<8x128xf32>
    %cst = arith.constant 1.000000e+01 : f32
    %3 = vector.broadcast %cst : f32 to vector<8x128xf32>
    %4 = arith.mulf %2, %3 : vector<8x128xf32>
    %5 = tpu.iota {dimensions = array<i32: 0>} : vector<8x128xi32>
    %6 = tpu.iota {dimensions = array<i32: 1>} : vector<8x128xi32>
    %c128_i32 = arith.constant 128 : i32
    %7 = vector.broadcast %c128_i32 : i32 to vector<8x128xi32>
    %8 = arith.muli %5, %7 : vector<8x128xi32>
    %9 = arith.addi %8, %6 : vector<8x128xi32>
    %cst_3 = arith.constant 0.000000e+00 : f32
    %10 = vector.broadcast %cst_3 : f32 to vector<8x128xf32>
    %cst_4 = arith.constant dense<0xFF800000> : vector<128xf32>
    %11 = vector.multi_reduction <maximumf>, %4, %cst_4 [0] : vector<8x128xf32> to vector<128xf32>
    %12 = vector.shape_cast %11 : vector<128xf32> to vector<1x128xf32>
    %cst_5 = arith.constant dense<0xFF800000> : vector<1xf32>
    %13 = vector.multi_reduction <maximumf>, %12, %cst_5 [1] : vector<1x128xf32> to vector<1xf32>
    %14 = vector.shape_cast %13 : vector<1xf32> to vector<1x1xf32>
    %15 = vector.broadcast %14 : vector<1x1xf32> to vector<8x128xf32>
    %16 = arith.cmpf oeq, %4, %15 : vector<8x128xf32>
    %c1024_i32 = arith.constant 1024 : i32
    %17 = vector.broadcast %c1024_i32 : i32 to vector<8x128xi32>
    %18 = arith.select %16, %9, %17 : vector<8x128xi1>, vector<8x128xi32>
    %cst_6 = arith.constant dense<2147483647> : vector<128xi32>
    %19 = vector.multi_reduction <minsi>, %18, %cst_6 [0] : vector<8x128xi32> to vector<128xi32>
    %20 = vector.shape_cast %19 : vector<128xi32> to vector<1x128xi32>
    %cst_7 = arith.constant dense<2147483647> : vector<1xi32>
    %21 = vector.multi_reduction <minsi>, %20, %cst_7 [1] : vector<1x128xi32> to vector<1xi32>
    %22 = vector.shape_cast %21 : vector<1xi32> to vector<1x1xi32>
    %23 = vector.broadcast %22 : vector<1x1xi32> to vector<8x128xi32>
    %24 = arith.cmpi eq, %9, %23 : vector<8x128xi32>
    %cst_8 = arith.constant 0xFF800000 : f32
    %25 = vector.broadcast %cst_8 : f32 to vector<1x1xf32>
    %26 = arith.cmpf ogt, %14, %25 : vector<1x1xf32>
    %27 = arith.extui %24 : vector<8x128xi1> to vector<8x128xi32>
    %28 = arith.sitofp %27 : vector<8x128xi32> to vector<8x128xf32>
    %cst_9 = arith.constant 0.000000e+00 : f32
    %29 = vector.shape_cast %26 : vector<1x1xi1> to vector<1x1xi1>
    %30 = vector.broadcast %29 : vector<1x1xi1> to vector<8x128xi1>
    %31 = vector.broadcast %cst_9 : f32 to vector<8x128xf32>
    %32 = arith.select %30, %28, %31 : vector<8x128xi1>, vector<8x128xf32>
    %33 = arith.addf %10, %32 : vector<8x128xf32>
    %c0_10 = arith.constant 0 : index
    %c0_11 = arith.constant 0 : index
    %34 = vector.load %arg3[%c0_10, %c0_11] : memref<8x128xf32, #tpu.memory_space<vmem>>, vector<8x128xf32>
    tpu.vector_store %arg3[%c0_10, %c0_11], %33 {strides = array<i32>} : memref<8x128xf32, #tpu.memory_space<vmem>>, vector<8x128xf32>,
    return
  }
  func.func @transform_0(%arg0: i32) -> (i32, i32) {
    %c0_i32 = arith.constant 0 : i32
    %c0_i32_0 = arith.constant 0 : i32
    %c0_i32_1 = arith.constant 0 : i32
    return %c0_i32, %c0_i32_0 : i32, i32
  }
  func.func @transform_1(%arg0: i32) -> (i32, i32) {
    %c0_i32 = arith.constant 0 : i32
    %c0_i32_0 = arith.constant 0 : i32
    %c0_i32_1 = arith.constant 0 : i32
    return %c0_i32, %c0_i32_0 : i32, i32
  }
  func.func @transform_2(%arg0: i32) -> (i32, i32) {
    %c0_i32 = arith.constant 0 : i32
    %c0_i32_0 = arith.constant 0 : i32
    %c0_i32_1 = arith.constant 0 : i32
    return %c0_i32, %c0_i32_0 : i32, i32
  }
}

</mosaic_0001>

<llo_original>
// kernel: tpu_custom_call.1
$region0: #{tpu_custom_call.1}
  #allocation0 [shape = 'u32[]', space=smem, size = 0x4, offset = 0x4, fixed_abs, tag = 'smem constant byte address 0x4 - core index']
  #allocation1 [shape = 'u32[144,128]{1,0:T(1,128)}', space=vmem, size = 0x12000, scoped, tag = 'internal scratch']
  %s0 = inlined_call_operand.hbm [shape: f32[8,128], index: 0, kind: input, shape index: {}]
  %s1 = inlined_call_operand.hbm [shape: f32[8,128], index: 1, kind: input, shape index: {}]
  %s2 = inlined_call_operand.hbm [shape: f32[8,128], index: 2, kind: output, shape index: {}]
  %s3 = sld [smem:[#allocation0]]
  $region26: #{tpu_custom_call.1} parent=0
    _
  %s5 = ssub.s32 1, %s3
  %s6 = scalar_select 0, %s5, %s3
  $region1: #{tpu_custom_call.1} parent=0
    #allocation2 [shape = 'u8[4096]{0}', space=vmem, size = 0x1000, scoped, tag = 'input window, operand 0, single buffered']
    #allocation3 [shape = 's32[1]{0}', space=sflag, size = 0x4, scoped, tag = 'scoped memory for tpu_custom_call.1']
    #allocation4 [shape = 's32[1]{0}', space=sflag, size = 0x4, scoped, tag = 'scoped memory for tpu_custom_call.1']
    #allocation5 [shape = 'u8[4096]{0}', space=vmem, size = 0x1000, scoped, tag = 'input window, operand 1, single buffered']
    #allocation6 [shape = 's32[1]{0}', space=sflag, size = 0x4, scoped, tag = 'scoped memory for tpu_custom_call.1']
    #allocation7 [shape = 'u8[4096]{0}', space=vmem, size = 0x1000, scoped, tag = 'output window, operand 0, single buffered']
    %7 = vsyncpa [#allocation3], 0
    %8 = vsyncpa [#allocation6], 0
    %9 = vsyncpa [#allocation4], 0
    // Predicated region
    $region2: #{tpu_custom_call.1} parent=1 // pred_check
      _
    $region3: #{tpu_custom_call.1} parent=1 // pred_check_branch
      %11 = sbr.rel (0) target = $region5
    $region4: #{tpu_custom_call.1} parent=1 // pred_region
      %s13 = ssub.s32 128, 128
      %14 = vsyncadd [#allocation3], %s13
      %s16 = sshll.u32 [#allocation2], 4
      %s17 = int_to_ptr.vmem [resolvable:$true] %s16
      %19 = dma.hbm_to_vmem [thread:$0]  %s0, 128, %s17, [#allocation3]
    $region5: #{tpu_custom_call.1} parent=1 // pred_fallthru
      _
    // Predicated region
    $region6: #{tpu_custom_call.1} parent=1 // pred_check
      _
    $region7: #{tpu_custom_call.1} parent=1 // pred_check_branch
      %21 = sbr.rel (0) target = $region9
    $region8: #{tpu_custom_call.1} parent=1 // pred_region
      %s23 = ssub.s32 128, 128
      %24 = vsyncadd [#allocation6], %s23
      %s26 = sshll.u32 [#allocation5], 4
      %s27 = int_to_ptr.vmem [resolvable:$true] %s26
      %29 = dma.hbm_to_vmem [thread:$0]  %s1, 128, %s27, [#allocation6]
    $region9: #{tpu_custom_call.1} parent=1 // pred_fallthru
      _
    // Predicated region
    $region10: #{tpu_custom_call.1} parent=1 // pred_check
      _
    $region11: #{tpu_custom_call.1} parent=1 // pred_check_branch
      %31 = sbr.rel (0) target = $region13
    $region12: #{tpu_custom_call.1} parent=1 // pred_region
      %32 = dma.done [#allocation3], 128
    $region13: #{tpu_custom_call.1} parent=1 // pred_fallthru
      _
    // Predicated region
    $region14: #{tpu_custom_call.1} parent=1 // pred_check
      _
    $region15: #{tpu_custom_call.1} parent=1 // pred_check_branch
      %34 = sbr.rel (0) target = $region17
    $region16: #{tpu_custom_call.1} parent=1 // pred_region
      %35 = dma.done [#allocation6], 128
    $region17: #{tpu_custom_call.1} parent=1 // pred_fallthru
      _
    %v36 = vld [vmem:[#allocation2] sm:$0xff]
    %v37 = vld [vmem:[#allocation5] sm:$0xff]
    %v38 = vadd.f32 %v36, %v37
    %v39 = vmul.f32 %v38, 10.0
    %v40 = vlaneseq
    %v41 = vshrl.u32 %v40, 7
    %v42 = vlaneseq
    %v43 = vand.u32 %v42, 127
    %v44 = vmul.u32 %v41, 128
    %v45 = vadd.s32 %v44, %v43
    %v46 = vrot.slane %v39, 4
    %v47 = vmax.f32 %v39, %v46
    %v48 = vrot.slane %v47, 2
    %v49 = vmax.f32 %v47, %v48
    %v50 = vrot.slane %v49, 1
    %v51 = vmax.f32 %v49, %v50
    %52 = vmax.xlane.f32.xlu0 %v51
    %v53 = vpop.xlane.xlu0 %52
    %vm54 = vcmp.eq.f32.partialorder %v39, %v53
    %v55 = vsel %vm54, %v45, 1024
    %v56 = vrot.slane %v55, 4
    %vm57 = vcmp.lt.s32.totalorder %v55, %v56
    %v58 = vsel %vm57, %v55, %v56
    %v59 = vrot.slane %v58, 2
    %vm60 = vcmp.lt.s32.totalorder %v58, %v59
    %v61 = vsel %vm60, %v58, %v59
    %v62 = vrot.slane %v61, 1
    %vm63 = vcmp.lt.s32.totalorder %v61, %v62
    %v64 = vsel %vm63, %v61, %v62
    %v65 = vand.u32 %v64, 65535
    %v66 = vshra.s32 %v64, 16
    %v67 = vcvt.s32.f32 %v65
    %v68 = vcvt.s32.f32 %v66
    %69 = vmin.xlane.f32.xlu0 %v68
    %v70 = vpop.xlane.xlu0 %69
    %vm71 = vcmp.eq.f32.partialorder %v68, %v70
    %v72 = vsel %vm71, %v67, inf
    %73 = vmin.xlane.f32.xlu0 %v72
    %v74 = vpop.xlane.xlu0 %73
    %v75 = vcvt.f32.s32 %v74
    %v76 = vcvt.f32.s32 %v70
    %v77 = vshll.u32 %v76, 16
    %v78 = vadd.s32 %v77, %v75
    %vm79 = vcmp.eq.s32.totalorder %v45, %v78
    %vm80 = vcmp.gt.f32.partialorder %v53, -inf
    %v81 = vsel %vm79, 1, 0
    %v82 = vcvt.s32.f32 %v81
    %v83 = vsel %vm80, 1, 0
    %vm84 = vcmp.eq.s32.totalorder %v83, 1
    %v85 = vsel %vm84, %v82, 0.0
    %v86 = vadd.f32 %v85, 0.0
    %87 = vst [vmem:[#allocation7] sm:$0xff] %v86
    // Predicated region
    $region18: #{tpu_custom_call.1} parent=1 // pred_check
      _
    $region19: #{tpu_custom_call.1} parent=1 // pred_check_branch
      %89 = sbr.rel (0) target = $region21
    $region20: #{tpu_custom_call.1} parent=1 // pred_region
      %s91 = ssub.s32 128, 128
      %92 = vsyncadd [#allocation4], %s91
      %s94 = sshll.u32 [#allocation7], 4
      %s95 = int_to_ptr.vmem [resolvable:$true] %s94
      %97 = dma.vmem_to_hbm [thread:$0]  %s95, 128, %s2, [#allocation4]
    $region21: #{tpu_custom_call.1} parent=1 // pred_fallthru
      _
    // Predicated region
    $region22: #{tpu_custom_call.1} parent=1 // pred_check
      _
    $region23: #{tpu_custom_call.1} parent=1 // pred_check_branch
      %99 = sbr.rel (0) target = $region25
    $region24: #{tpu_custom_call.1} parent=1 // pred_region
      %100 = dma.done [#allocation4], 128
    $region25: #{tpu_custom_call.1} parent=1 // pred_fallthru
      _
    %101 = vsyncpa [#allocation3], 1
    %102 = vsyncpa [#allocation6], 1
    %103 = vsyncpa [#allocation4], 1

</llo_original>
